<compile_context>
chip_gen: v6e
topology: v6e:2x2x1
jax: 0.10.0
libtpu: 0.0.40
codegen_flags: <defaults>
</compile_context>

<pallas_src>
import jax
import jax.numpy as jnp
from jax.experimental import pallas as pl
from jax.experimental.pallas import tpu as pltpu


def _round_up(x, m):
    return (x + m - 1) // m * m


def _largest_tile(dim, cap, granule):
    """Largest multiple of `granule` that divides `dim` and is <= cap (dim % granule == 0)."""
    t = min(cap, dim)
    t -= t % granule
    while t >= granule:
        if dim % t == 0:
            return t
        t -= granule
    return dim


def _linear_kernel(x_ref, w_ref, b_ref, o_ref):
    """One (tm, tn) output tile; grid axis 2 is the K reduction. Accumulates into o_ref."""
    k = pl.program_id(2)

    # bf16 x bf16 -> f32 MXU pass (cast is a no-op if weights were kept f32).
    partial = jnp.dot(x_ref[...].astype(w_ref.dtype), w_ref[...],
                      preferred_element_type=jnp.float32)

    @pl.when(k == 0)
    def _init():
        o_ref[...] = partial

    @pl.when(k != 0)
    def _accum():
        o_ref[...] += partial

    @pl.when(k == pl.num_programs(2) - 1)
    def _finalize():
        # Bias added once per output tile, outside the hot K loop (f32 epilogue).
        o_ref[...] += b_ref[...]


def prepare_linear_params(weight, bias, *, compute_dtype=jnp.bfloat16):
    """One-time prep: transpose PyTorch-layout weight to (in, out), cast to the MXU
    compute dtype, and zero-pad K to a multiple of 128 and N to a multiple of 256
    (keeps the 256-wide v6e/v7x MXU full).  Call once at init, NOT per forward call."""
    out_f, in_f = weight.shape
    k_pad = _round_up(in_f, 128)
    n_pad = _round_up(out_f, 256)
    w_t = (jnp.zeros((k_pad, n_pad), compute_dtype)
           .at[:in_f, :out_f].set(weight.T.astype(compute_dtype)))
    b2 = (jnp.zeros((1, n_pad), jnp.float32)
          .at[0, :out_f].set(bias.astype(jnp.float32)))
    return w_t, b2


def lr_forward(x, w_padded, b_padded, out_features, *, force_pallas=False):
    """Equivalent of PyTorch LR.forward: out = x @ weight.T + bias.

    x:        (batch, in_features) float32
    w_padded: (K_pad, N_pad) pre-transposed, padded, bf16 weight from prepare_linear_params
    b_padded: (1, N_pad) padded f32 bias from prepare_linear_params
    """
    batch, in_f = x.shape
    k_pad, n_pad = w_padded.shape

    # Small-problem fast path: pallas_call fixed overhead + padding blow-up dominate.
    if not force_pallas and batch * k_pad * n_pad < (1 << 24):
        y = jnp.dot(x.astype(w_padded.dtype), w_padded[:in_f, :out_features],
                    preferred_element_type=jnp.float32)
        return (y + b_padded[0, :out_features]).astype(x.dtype)

    k_needs_pad = (in_f != k_pad)

    # --- M tiling / padding policy (pad to 8, never to tm) ---
    if batch % 8 == 0:
        m_pad, pad_m = batch, False
        tm = _largest_tile(m_pad, 512, 8)
    elif (not k_needs_pad) and batch <= 1024:
        # Ragged batch but K already aligned: full-M block, no activation pad copy.
        m_pad, pad_m = batch, False
        tm = m_pad
    else:
        m_pad, pad_m = _round_up(batch, 8), True
        tm = _largest_tile(m_pad, 512, 8)

    tn = _largest_tile(n_pad, 512, 128)
    tk = _largest_tile(k_pad, 1024, 128)

    # If both parallel axes are 1, split N so both v7x TensorCores get work.
    if (m_pad // tm) * (n_pad // tn) == 1 and n_pad >= 256:
        tn = n_pad // 2  # n_pad is a multiple of 256 -> tn stays a multiple of 128

    # Materialize padded activations only when truly needed (ragged K and/or M).
    if pad_m or k_needs_pad:
        x_p = jnp.zeros((m_pad, k_pad), x.dtype).at[:batch, :in_f].set(x)
    else:
        x_p = x

    grid = (m_pad // tm, n_pad // tn, k_pad // tk)

    flops = 2 * m_pad * n_pad * k_pad
    bytes_accessed = (m_pad * k_pad * x_p.dtype.itemsize
                      + k_pad * n_pad * w_padded.dtype.itemsize
                      + n_pad * b_padded.dtype.itemsize
                      + m_pad * n_pad * 4)

    out_padded = pl.pallas_call(
        _linear_kernel,
        out_shape=jax.ShapeDtypeStruct((m_pad, n_pad), jnp.float32),
        grid=grid,
        in_specs=[
            pl.BlockSpec((tm, tk), lambda i, j, k: (i, k)),   # x tile
            pl.BlockSpec((tk, tn), lambda i, j, k: (k, j)),   # W^T tile (bf16)
            pl.BlockSpec((1, tn), lambda i, j, k: (0, j)),    # bias, resident across K
        ],
        out_specs=pl.BlockSpec((tm, tn), lambda i, j, k: (i, j)),
        compiler_params=pltpu.CompilerParams(
            dimension_semantics=("parallel", "parallel", "arbitrary"),
            vmem_limit_bytes=32 * 1024 * 1024),
        cost_estimate=pl.CostEstimate(flops=flops,
                                      bytes_accessed=bytes_accessed,
                                      transcendentals=0),
    )(x_p, w_padded, b_padded)

    # Slice back to the logical (unpadded) output.
    return out_padded[:batch, :out_features].astype(x.dtype)


if __name__ == "__main__":
    # Small shapes consistent with the module: LR(inputs_size=32, output_size=16), batch=8.
    batch, inputs_size, output_size = 8, 32, 16

    key = jax.random.PRNGKey(0)
    kx, kw, kb = jax.random.split(key, 3)

    # nn.Linear default init: U(-1/sqrt(inputs_size), 1/sqrt(inputs_size))
    bound = 1.0 / (inputs_size ** 0.5)
    weight = jax.random.uniform(
        kw, (output_size, inputs_size), jnp.float32, minval=-bound, maxval=bound)
    bias = jax.random.uniform(
        kb, (output_size,), jnp.float32, minval=-bound, maxval=bound)
    x = jax.random.normal(kx, (batch, inputs_size), jnp.float32)

    # One-time parameter prep (transpose + pad + bf16 cast) -- not in the per-call path.
    w_padded, b_padded = prepare_linear_params(weight, bias)

    # Force the Pallas path so the kernel is exercised at demo size.
    out = lr_forward(x, w_padded, b_padded, output_size, force_pallas=True)
    out = jax.block_until_ready(out)

    # Correctness check against plain-JAX f32 reference (relaxed: bf16 operands).
    ref = x @ weight.T + bias
    assert out.shape == (batch, output_size)
    assert jnp.allclose(out, ref, atol=2e-2, rtol=2e-2), float(jnp.max(jnp.abs(out - ref)))

    print("KERNEL_OK")
</pallas_src>

<mosaic_0001>
module attributes {stable_mosaic.version = 11 : i64} {
  func.func @_linear_kernel(%arg0: i32, %arg1: i32, %arg2: i32, %arg3: memref<8x128xf32, #tpu.memory_space<vmem>>, %arg4: memref<128x128xbf16, #tpu.memory_space<vmem>>, %arg5: memref<1x128xf32, #tpu.memory_space<vmem>>, %arg6: memref<8x128xf32, #tpu.memory_space<vmem>>) attributes {dimension_semantics = [#tpu.dimension_semantics<parallel>, #tpu.dimension_semantics<parallel>, #tpu.dimension_semantics<arbitrary>], iteration_bounds = array<i64: 1, 2, 1>, scalar_prefetch = 0 : i64, scratch_operands = 0 : i64, tpu.core_type = #tpu.core_type<tc>, window_params = [{transform_indices = @transform_0, window_bounds = array<i64: 8, 128>}, {transform_indices = @transform_1, window_bounds = array<i64: 128, 128>}, {transform_indices = @transform_2, window_bounds = array<i64: 1, 128>}, {transform_indices = @transform_3, window_bounds = array<i64: 8, 128>}]} {
    %c0 = arith.constant 0 : index
    %c0_0 = arith.constant 0 : index
    %0 = vector.load %arg3[%c0, %c0_0] : memref<8x128xf32, #tpu.memory_space<vmem>>, vector<8x128xf32>
    %1 = arith.truncf %0 : vector<8x128xf32> to vector<8x128xbf16>
    %c0_1 = arith.constant 0 : index
    %c0_2 = arith.constant 0 : index
    %2 = vector.load %arg4[%c0_1, %c0_2] : memref<128x128xbf16, #tpu.memory_space<vmem>>, vector<128x128xbf16>
    %cst = arith.constant dense<0.000000e+00> : vector<8x128xf32>
    %3 = tpu.matmul %1, %2, %cst {dimension_numbers = #tpu.dot_dimension_numbers<[1], [0], [0], [1], [0, 0, 1, 1], [], []>} : vector<8x128xbf16>, vector<128x128xbf16>, vector<8x128xf32> -> vector<8x128xf32>
    %c0_i32 = arith.constant 0 : i32
    %4 = arith.cmpi eq, %arg2, %c0_i32 : i32
    %5 = arith.extui %4 : i1 to i32
    %c0_i32_3 = arith.constant 0 : i32
    %6 = arith.cmpi ne, %5, %c0_i32_3 : i32
    scf.if %6 {
      %c0_8 = arith.constant 0 : index
      %c0_9 = arith.constant 0 : index
      %13 = vector.load %arg6[%c0_8, %c0_9] : memref<8x128xf32, #tpu.memory_space<vmem>>, vector<8x128xf32>
      tpu.vector_store %arg6[%c0_8, %c0_9], %3 {strides = array<i32>} : memref<8x128xf32, #tpu.memory_space<vmem>>, vector<8x128xf32>,
    } else {
    }
    %c0_i32_4 = arith.constant 0 : i32
    %7 = arith.cmpi ne, %arg2, %c0_i32_4 : i32
    %8 = arith.extui %7 : i1 to i32
    %c0_i32_5 = arith.constant 0 : i32
    %9 = arith.cmpi ne, %8, %c0_i32_5 : i32
    scf.if %9 {
      %c0_8 = arith.constant 0 : index
      %c0_9 = arith.constant 0 : index
      %13 = vector.load %arg6[%c0_8, %c0_9] : memref<8x128xf32, #tpu.memory_space<vmem>>, vector<8x128xf32>
      %14 = arith.addf %13, %3 : vector<8x128xf32>
      %c0_10 = arith.constant 0 : index
      %c0_11 = arith.constant 0 : index
      %15 = vector.load %arg6[%c0_10, %c0_11] : memref<8x128xf32, #tpu.memory_space<vmem>>, vector<8x128xf32>
      tpu.vector_store %arg6[%c0_10, %c0_11], %14 {strides = array<i32>} : memref<8x128xf32, #tpu.memory_space<vmem>>, vector<8x128xf32>,
    } else {
    }
    %c0_i32_6 = arith.constant 0 : i32
    %10 = arith.cmpi eq, %arg2, %c0_i32_6 : i32
    %11 = arith.extui %10 : i1 to i32
    %c0_i32_7 = arith.constant 0 : i32
    %12 = arith.cmpi ne, %11, %c0_i32_7 : i32
    scf.if %12 {
      %c0_8 = arith.constant 0 : index
      %c0_9 = arith.constant 0 : index
      %13 = vector.load %arg6[%c0_8, %c0_9] : memref<8x128xf32, #tpu.memory_space<vmem>>, vector<8x128xf32>
      %c0_10 = arith.constant 0 : index
      %c0_11 = arith.constant 0 : index
      %14 = vector.load %arg5[%c0_10, %c0_11] : memref<1x128xf32, #tpu.memory_space<vmem>>, vector<1x128xf32>
      %15 = vector.broadcast %14 : vector<1x128xf32> to vector<8x128xf32>
      %16 = arith.addf %13, %15 : vector<8x128xf32>
      %c0_12 = arith.constant 0 : index
      %c0_13 = arith.constant 0 : index
      %17 = vector.load %arg6[%c0_12, %c0_13] : memref<8x128xf32, #tpu.memory_space<vmem>>, vector<8x128xf32>
      tpu.vector_store %arg6[%c0_12, %c0_13], %16 {strides = array<i32>} : memref<8x128xf32, #tpu.memory_space<vmem>>, vector<8x128xf32>,
    } else {
    }
    return
  }
  func.func @transform_0(%arg0: i32, %arg1: i32, %arg2: i32) -> (i32, i32) {
    %c0_i32 = arith.constant 0 : i32
    return %arg0, %arg2 : i32, i32
  }
  func.func @transform_1(%arg0: i32, %arg1: i32, %arg2: i32) -> (i32, i32) {
    %c0_i32 = arith.constant 0 : i32
    return %arg2, %arg1 : i32, i32
  }
  func.func @transform_2(%arg0: i32, %arg1: i32, %arg2: i32) -> (i32, i32) {
    %c0_i32 = arith.constant 0 : i32
    %c0_i32_0 = arith.constant 0 : i32
    return %c0_i32, %arg1 : i32, i32
  }
  func.func @transform_3(%arg0: i32, %arg1: i32, %arg2: i32) -> (i32, i32) {
    %c0_i32 = arith.constant 0 : i32
    return %arg0, %arg1 : i32, i32
  }
}

</mosaic_0001>

<llo_original>
// kernel: tpu_custom_call.1
$region0: #{tpu_custom_call.1}
  #allocation0 [shape = 'u32[]', space=smem, size = 0x4, offset = 0x4, fixed_abs, tag = 'smem constant byte address 0x4 - core index']
  #allocation1 [shape = 'u32[144,128]{1,0:T(1,128)}', space=vmem, size = 0x12000, scoped, tag = 'internal scratch']
  %s0 = inlined_call_operand.hbm [shape: f32[8,128], index: 0, kind: input, shape index: {}]
  %s1 = inlined_call_operand.hbm [shape: bf16[128,256], index: 1, kind: input, shape index: {}]
  %s2 = inlined_call_operand.vmem [shape: f32[1,256], index: 2, kind: input, shape index: {}]
  %s3 = inlined_call_operand.hbm [shape: f32[8,256], index: 3, kind: output, shape index: {}]
  %s4 = sld [smem:[#allocation0]]
  $region65: #{tpu_custom_call.1} parent=0
    _
  %s6 = ssub.s32 1, %s4
  %s7 = scalar_select 0, %s6, %s4
  $region1: #{tpu_custom_call.1} parent=0
    #allocation2 [shape = 'u8[4096]{0}', space=vmem, size = 0x1000, scoped, tag = 'input window, operand 0, single buffered']
    #allocation3 [shape = 's32[2]{0}', space=sflag, size = 0x8, scoped, tag = 'scoped memory for tpu_custom_call.1']
    #allocation4 [shape = 's32[2]{0}', space=sflag, size = 0x8, scoped, tag = 'scoped memory for tpu_custom_call.1']
    #allocation5 [shape = 'u8[65536]{0}', space=vmem, size = 0x10000, scoped, tag = 'input window, operand 1']
    #allocation6 [shape = 's32[2]{0}', space=sflag, size = 0x8, scoped, tag = 'scoped memory for tpu_custom_call.1']
    #allocation7 [shape = 'u8[8192]{0}', space=vmem, size = 0x2000, scoped, tag = 'output window, operand 0']
    %8 = vsyncpa [#allocation3], 0
    %9 = vsyncpa [#allocation6], 0
    %s10 = scalar_lea.sflag [#allocation6], 1
    %11 = vsyncpa %s10, 0
    %12 = vsyncpa [#allocation4], 0
    %s13 = scalar_lea.sflag [#allocation4], 1
    %14 = vsyncpa %s13, 0
    loop: start=0, step=1, limit=4
    $region2: #{tpu_custom_call.1} parent=1 // loop_pre_header
      _
    $region3: #{tpu_custom_call.1} parent=1 // loop_header
      %s16 = sphi 0, %s20
      %p17 = scmp.ge.s32.totalorder %s16, 4
      %s23 = sphi 0, %s42
      %s24 = sphi 0, %s38
      %s25 = sphi 0, %s34
      %s26 = sphi 0, %s23
      %s27 = sphi 0, %s24
      %s28 = sphi 0, %s25
      %s29 = sphi 0, %s26
      %s30 = sphi 0, %s27
      %s31 = sphi 0, %s28
      %s47 = sphi 0, %s49
      %s50 = sphi 0, %s47
      %s51 = sphi 0, %s50
      %s67 = sphi 0, %s51
      %s75 = sphi 0, %s77
      %s78 = sphi 0, %s75
      %s79 = sphi 0, %s78
      %s95 = sphi 0, %s79
      %s101 = sphi 0, %s103
      %s104 = sphi 0, %s101
      %s105 = sphi 0, %s104
      %s121 = sphi 0, %s105
      %s129 = sphi 0, %s131
      %s132 = sphi 0, %s129
      %s133 = sphi 0, %s132
      %s149 = sphi 0, %s133
    $region4: #{tpu_custom_call.1} parent=1 // loop_header_branch
      %19 = sbr.rel (%p17) target = $region8
    $region5: #{tpu_custom_call.1} parent=1 // loop_body
      %s21 = ssub.s32 %s16, 1
      %s22 = ssub.s32 %s16, 2
      %s32 = sadd.s32 1, %s25
      %p33 = scmp.ge.s32.totalorder %s32, 1
      %s34 = scalar_select %p33, 0, %s32
      %s35 = sadd.s32 1, %s24
      %s36 = scalar_select %p33, %s35, %s24
      %p37 = scmp.ge.s32.totalorder %s36, 2
      %s38 = scalar_select %p37, 0, %s36
      %s39 = sadd.s32 1, %s23
      %s40 = scalar_select %p37, %s39, %s23
      %p41 = scmp.ge.s32.totalorder %s40, 1
      %s42 = scalar_select %p41, 0, %s40
      %s43 = ssub.s32 %s23, %s42
      %s44 = ssub.s32 %s25, %s34
      %s45 = sor.u32 %s43, %s44
      %p46 = scmp.eq.s32.totalorder %s45, 0
      %s48 = sadd.s32 %s47, 1
      %s49 = scalar_select %p46, %s47, %s48
      %p52 = pneg %p46
      %p53 = scmp.eq.s32.totalorder %s16, 1
      %p54 = por %p52, %p53
      %p55 = scmp.ne.s32.totalorder %s47, %s50
      %p56 = scmp.eq.s32.totalorder %s16, 0
      %p57 = por %p55, %p56
      %p58 = scmp.ne.s32.totalorder %s47, %s50
      %p59 = scmp.eq.s32.totalorder %s21, 1
      %p60 = por %p58, %p59
      %p61 = scmp.ne.s32.totalorder %s50, %s51
      %p62 = scmp.eq.s32.totalorder %s21, 0
      %p63 = por %p61, %p62
      %p64 = scmp.ne.s32.totalorder %s50, %s51
      %p65 = scmp.eq.s32.totalorder %s22, 1
      %p66 = por %p64, %p65
      %p68 = scmp.ne.s32.totalorder %s51, %s67
      %p69 = scmp.eq.s32.totalorder %s22, 0
      %p70 = por %p68, %p69
      %s71 = ssub.s32 %s25, %s34
      %s72 = ssub.s32 %s24, %s38
      %s73 = sor.u32 %s71, %s72
      %p74 = scmp.eq.s32.totalorder %s73, 0
      %s76 = sadd.s32 %s75, 1
      %s77 = scalar_select %p74, %s75, %s76
      %p80 = pneg %p74
      %p81 = scmp.eq.s32.totalorder %s16, 1
      %p82 = por %p80, %p81
      %p83 = scmp.ne.s32.totalorder %s75, %s78
      %p84 = scmp.eq.s32.totalorder %s16, 0
      %p85 = por %p83, %p84
      %p86 = scmp.ne.s32.totalorder %s75, %s78
      %p87 = scmp.eq.s32.totalorder %s21, 1
      %p88 = por %p86, %p87
      %p89 = scmp.ne.s32.totalorder %s78, %s79
      %p90 = scmp.eq.s32.totalorder %s21, 0
      %p91 = por %p89, %p90
      %p92 = scmp.ne.s32.totalorder %s78, %s79
      %p93 = scmp.eq.s32.totalorder %s22, 1
      %p94 = por %p92, %p93
      %p96 = scmp.ne.s32.totalorder %s79, %s95
      %p97 = scmp.eq.s32.totalorder %s22, 0
      %p98 = por %p96, %p97
      %s99 = ssub.s32 %s24, %s38
      %p100 = scmp.eq.s32.totalorder %s99, 0
      %s102 = sadd.s32 %s101, 1
      %s103 = scalar_select %p100, %s101, %s102
      %p106 = pneg %p100
      %p107 = scmp.eq.s32.totalorder %s16, 1
      %p108 = por %p106, %p107
      %p109 = scmp.ne.s32.totalorder %s101, %s104
      %p110 = scmp.eq.s32.totalorder %s16, 0
      %p111 = por %p109, %p110
      %p112 = scmp.ne.s32.totalorder %s101, %s104
      %p113 = scmp.eq.s32.totalorder %s21, 1
      %p114 = por %p112, %p113
      %p115 = scmp.ne.s32.totalorder %s104, %s105
      %p116 = scmp.eq.s32.totalorder %s21, 0
      %p117 = por %p115, %p116
      %p118 = scmp.ne.s32.totalorder %s104, %s105
      %p119 = scmp.eq.s32.totalorder %s22, 1
      %p120 = por %p118, %p119
      %p122 = scmp.ne.s32.totalorder %s105, %s121
      %p123 = scmp.eq.s32.totalorder %s22, 0
      %p124 = por %p122, %p123
      %s125 = ssub.s32 %s23, %s42
      %s126 = ssub.s32 %s24, %s38
      %s127 = sor.u32 %s125, %s126
      %p128 = scmp.eq.s32.totalorder %s127, 0
      %s130 = sadd.s32 %s129, 1
      %s131 = scalar_select %p128, %s129, %s130
      %p134 = pneg %p128
      %p135 = scmp.eq.s32.totalorder %s16, 1
      %p136 = por %p134, %p135
      %p137 = scmp.ne.s32.totalorder %s129, %s132
      %p138 = scmp.eq.s32.totalorder %s16, 0
      %p139 = por %p137, %p138
      %p140 = scmp.ne.s32.totalorder %s129, %s132
      %p141 = scmp.eq.s32.totalorder %s21, 1
      %p142 = por %p140, %p141
      %p143 = scmp.ne.s32.totalorder %s132, %s133
      %p144 = scmp.eq.s32.totalorder %s21, 0
      %p145 = por %p143, %p144
      %p146 = scmp.ne.s32.totalorder %s132, %s133
      %p147 = scmp.eq.s32.totalorder %s22, 1
      %p148 = por %p146, %p147
      %p150 = scmp.ne.s32.totalorder %s133, %s149
      %p151 = scmp.eq.s32.totalorder %s22, 0
      %p152 = por %p150, %p151
      %p153 = scmp.le.s32.totalorder 1, %s16
      %p154 = scmp.lt.s32.totalorder %s16, 3
      %p155 = pnand %p153, %p154
      %p156 = pneg %p155
      // Predicated region
      $region9: #{tpu_custom_call.1} parent=5 // pred_check
        _
      $region10: #{tpu_custom_call.1} parent=5 // pred_check_branch
        %158 = sbr.rel (%p155) target = $region12
      $region11: #{tpu_custom_call.1} parent=5 // pred_region
        %s159 = ssub.s32 %s16, 1
        // Predicated region
        $region13: #{tpu_custom_call.1} parent=11 // pred_check
          %p160 = pneg %p63
        $region14: #{tpu_custom_call.1} parent=11 // pred_check_branch
          %162 = sbr.rel (%p160) target = $region16
        $region15: #{tpu_custom_call.1} parent=11 // pred_region
          %s164 = ssub.s32 128, 128
          %165 = vsyncadd [#allocation3], %s164
          %s166 = sadd.s32 %s28, %s26
          %s167 = smul.addr %s166, 128
          %s168 = scalar_lea.hbm %s0, %s167
          %s170 = sshll.u32 [#allocation2], 4
          %s171 = int_to_ptr.vmem [resolvable:$true] %s170
          %173 = dma.hbm_to_vmem [thread:$0]  %s168, 128, %s171, [#allocation3]
        $region16: #{tpu_custom_call.1} parent=11 // pred_fallthru
          _
      $region12: #{tpu_custom_call.1} parent=5 // pred_fallthru
        _
      %p174 = scmp.lt.s32.totalorder %s16, 2
      // Predicated region
      $region17: #{tpu_custom_call.1} parent=5 // pred_check
        %p175 = pneg %p174
      $region18: #{tpu_custom_call.1} parent=5 // pred_check_branch
        %177 = sbr.rel (%p175) target = $region20
      $region19: #{tpu_custom_call.1} parent=5 // pred_region
        // Predicated region
        $region21: #{tpu_custom_call.1} parent=19 // pred_check
          %p178 = pneg %p85
        $region22: #{tpu_custom_call.1} parent=19 // pred_check_branch
          %180 = sbr.rel (%p178) target = $region24
        $region23: #{tpu_custom_call.1} parent=19 // pred_region
          %s181 = sand.u32 %s75, 1
          %s182 = scalar_lea.sflag [#allocation6], %s181
          %s183 = sand.u32 %s75, 1
          %s184 = smul.addr %s183, 64
          %s185 = scalar_lea.vmem [#allocation5], %s184
          %s186 = smul.u32 16, %s25
          %s188 = ssub.s32 1024, 1024
          %189 = vsyncadd %s182, %s188
          %s190 = smul.addr %s186, 2
          %s191 = sadd.s32 %s24, %s190
          %s192 = smul.addr %s191, 64
          %s193 = scalar_lea.hbm %s1, %s192
          %s194 = sshll.u32 %s185, 4
          %s195 = int_to_ptr.vmem [resolvable:$true] %s194
          %200 = dma.hbm_to_vmem [thread:$0]  %s193, 1024, %s195, %s182, 128, 64, 4
        $region24: #{tpu_custom_call.1} parent=19 // pred_fallthru
          _
        // Predicated region
        $region25: #{tpu_custom_call.1} parent=19 // pred_check
          %p201 = pneg %p111
        $region26: #{tpu_custom_call.1} parent=19 // pred_check_branch
          %203 = sbr.rel (%p201) target = $region28
        $region27: #{tpu_custom_call.1} parent=19 // pred_region
          %p204 = scmp.lt.s32.totalorder %s24, 1
          %s205 = scalar_select %p204, %s24, 1
          %s206 = scalar_lea.vmem %s2, %s205
        $region28: #{tpu_custom_call.1} parent=19 // pred_fallthru
          _
      $region20: #{tpu_custom_call.1} parent=5 // pred_fallthru
        _
      %p207 = scmp.le.s32.totalorder 1, %s16
      %p208 = scmp.lt.s32.totalorder %s16, 3
      %p209 = pnand %p207, %p208
      %p210 = pneg %p209
      // Predicated region
      $region29: #{tpu_custom_call.1} parent=5 // pred_check
        _
      $region30: #{tpu_custom_call.1} parent=5 // pred_check_branch
        %212 = sbr.rel (%p209) target = $region32
      $region31: #{tpu_custom_call.1} parent=5 // pred_region
        %s213 = ssub.s32 %s16, 1
        // Predicated region
        $region33: #{tpu_custom_call.1} parent=31 // pred_check
          %p214 = pneg %p63
        $region34: #{tpu_custom_call.1} parent=31 // pred_check_branch
          %216 = sbr.rel (%p214) target = $region36
        $region35: #{tpu_custom_call.1} parent=31 // pred_region
          %217 = dma.done [#allocation3], 128
        $region36: #{tpu_custom_call.1} parent=31 // pred_fallthru
          _
        %s218 = sand.u32 %s78, 1
        %s219 = scalar_lea.sflag [#allocation6], %s218
        %s220 = sand.u32 %s78, 1
        %s221 = smul.addr %s220, 64
        %s222 = scalar_lea.vmem [#allocation5], %s221
        // Predicated region
        $region37: #{tpu_custom_call.1} parent=31 // pred_check
          %p223 = pneg %p91
        $region38: #{tpu_custom_call.1} parent=31 // pred_check_branch
          %225 = sbr.rel (%p223) target = $region40
        $region39: #{tpu_custom_call.1} parent=31 // pred_region
          %226 = dma.done %s219, 1024
        $region40: #{tpu_custom_call.1} parent=31 // pred_fallthru
          _
        %p227 = pneg %p63
        %p228 = pneg %p60
        %s229 = sand.u32 %s78, 1
        %s230 = scalar_lea.sflag [#allocation6], %s229
        %s231 = sand.u32 %s78, 1
        %s232 = smul.addr %s231, 64
        %s233 = scalar_lea.vmem [#allocation5], %s232
        %p234 = pneg %p91
        %p235 = pneg %p88
        %p236 = scmp.lt.s32.totalorder %s27, 1
        %s237 = scalar_select %p236, %s27, 1
        %s238 = scalar_lea.vmem %s2, %s237
        %p239 = pneg %p117
        %p240 = pneg %p114
        %p241 = pneg %p145
        %p242 = pneg %p142
        %s243 = sand.u32 %s132, 1
        %s244 = scalar_lea.sflag [#allocation4], %s243
        %s245 = sand.u32 %s132, 1
        %s246 = smul.addr %s245, 8
        %s247 = scalar_lea.vmem [#allocation7], %s246
        %s248 = smul.u32 16, %s28
        %p249 = scmp.lt.s32.totalorder %s27, 1
        %s250 = scalar_select %p249, %s27, 1
        %s251 = scalar_lea.vmem %s2, %s250
        %v253 = vld [vmem:[#allocation2] sm:$0xff]
        %v254 = vpack.c.bf16 %v253, %v253
        %v255 = vld [vmem:[%s222] sm:$0xf]
        %v256 = vld [vmem:[%s222 + $0x4] sm:$0xf]
        %v257 = vld [vmem:[%s222 + $0x8] sm:$0xf]
        %v258 = vld [vmem:[%s222 + $0xc] sm:$0xf]
        %v259 = vld [vmem:[%s222 + $0x10] sm:$0xf]
        %v260 = vld [vmem:[%s222 + $0x14] sm:$0xf]
        %v261 = vld [vmem:[%s222 + $0x18] sm:$0xf]
        %v262 = vld [vmem:[%s222 + $0x1c] sm:$0xf]
        %v263 = vld [vmem:[%s222 + $0x20] sm:$0xf]
        %v264 = vld [vmem:[%s222 + $0x24] sm:$0xf]
        %v265 = vld [vmem:[%s222 + $0x28] sm:$0xf]
        %v266 = vld [vmem:[%s222 + $0x2c] sm:$0xf]
        %v267 = vld [vmem:[%s222 + $0x30] sm:$0xf]
        %v268 = vld [vmem:[%s222 + $0x34] sm:$0xf]
        %v269 = vld [vmem:[%s222 + $0x38] sm:$0xf]
        %v270 = vld [vmem:[%s222 + $0x3c] sm:$0xf]
        %v287 = vunpack.c.l.b16 %v255
        %v288 = vunpack.c.l.b16 %v256
        %v289 = vunpack.c.l.b16 %v257
        %v290 = vunpack.c.l.b16 %v258
        %v291 = vunpack.c.l.b16 %v259
        %v292 = vunpack.c.l.b16 %v260
        %v293 = vunpack.c.l.b16 %v261
        %v294 = vunpack.c.l.b16 %v262
        %v295 = vunpack.c.l.b16 %v263
        %v296 = vunpack.c.l.b16 %v264
        %v297 = vunpack.c.l.b16 %v265
        %v298 = vunpack.c.l.b16 %v266
        %v299 = vunpack.c.l.b16 %v267
        %v300 = vunpack.c.l.b16 %v268
        %v301 = vunpack.c.l.b16 %v269
        %v302 = vunpack.c.l.b16 %v270
        %v303 = vpack.c.b16 %v288, %v287
        %v304 = vpack.c.b16 %v290, %v289
        %v305 = vpack.c.b16 %v292, %v291
        %v306 = vpack.c.b16 %v294, %v293
        %v307 = vpack.c.b16 %v296, %v295
        %v308 = vpack.c.b16 %v298, %v297
        %v309 = vpack.c.b16 %v300, %v299
        %v310 = vpack.c.b16 %v302, %v301
        %319 = vmatprep.subr.bf16.mxu0 0
        %320 = vmatpush1.bf16.msra.mxu0 %v310
        %321 = vmatprep.subr.bf16.mxu0 0
        %322 = vmatpush1.bf16.msra.mxu0 %v309
        %323 = vmatprep.subr.bf16.mxu0 0
        %324 = vmatpush1.bf16.msra.mxu0 %v308
        %325 = vmatprep.subr.bf16.mxu0 0
        %326 = vmatpush1.bf16.msra.mxu0 %v307
        %327 = vmatprep.subr.bf16.mxu0 0
        %328 = vmatpush1.bf16.msra.mxu0 %v306
        %329 = vmatprep.subr.bf16.mxu0 0
        %330 = vmatpush1.bf16.msra.mxu0 %v305
        %331 = vmatprep.subr.bf16.mxu0 0
        %332 = vmatpush1.bf16.msra.mxu0 %v304
        %333 = vmatprep.subr.bf16.mxu0 0
        %334 = vmatpush1.bf16.msra.mxu0 %v303
        %335 = vmatprep.subr.bf16.mxu0 0
        %336 = vmatpush2.bf16.msra.mxu0 0
        %337 = vmatprep.subr.bf16.mxu0 0
        %338 = vmatpush2.bf16.msra.mxu0 0
        %339 = vmatprep.subr.bf16.mxu0 0
        %340 = vmatpush2.bf16.msra.mxu0 0
        %341 = vmatprep.subr.bf16.mxu0 0
        %342 = vmatpush2.bf16.msra.mxu0 0
        %343 = vmatprep.subr.bf16.mxu0 0
        %344 = vmatpush2.bf16.msra.mxu0 0
        %345 = vmatprep.subr.bf16.mxu0 0
        %346 = vmatpush2.bf16.msra.mxu0 0
        %347 = vmatprep.subr.bf16.mxu0 0
        %348 = vmatpush2.bf16.msra.mxu0 0
        %349 = vmatprep.subr.bf16.mxu0 0
        %350 = vmatpush2.bf16.msra.mxu0 0
        %351 = vmatprep.mubr.bf16.mxu0 0
        %352 = vmatmul.mubr.bf16.gmra.mxu0 %v254
        %v353 = vpop.f32.mrf.mxu0
        %v354 = vadd.f32 0.0, %v353
        %v355 = vpop.f32.mrf.mxu0
        %v356 = vpop.f32.mrf.mxu0
        %v357 = vpop.f32.mrf.mxu0
        %358 = vdwg.mxu0
        %p359 = scmp.eq.s32.totalorder %s28, 0
        // Predicated region
        $region41: #{tpu_custom_call.1} parent=31 // pred_check
          %p360 = pneg %p359
        $region42: #{tpu_custom_call.1} parent=31 // pred_check_branch
          %362 = sbr.rel (%p360) target = $region44
        $region43: #{tpu_custom_call.1} parent=31 // pred_region
          %363 = vst [vmem:[%s247] sm:$0xff] %v354
        $region44: #{tpu_custom_call.1} parent=31 // pred_fallthru
          _
        %p364 = scmp.ne.s32.totalorder %s28, 0
        // Predicated region
        $region45: #{tpu_custom_call.1} parent=31 // pred_check
          %p365 = pneg %p364
        $region46: #{tpu_custom_call.1} parent=31 // pred_check_branch
          %367 = sbr.rel (%p365) target = $region48
        $region47: #{tpu_custom_call.1} parent=31 // pred_region
          %v368 = vld [vmem:[%s247] sm:$0xff]
          %v369 = vadd.f32 %v368, %v354
          %370 = vst [vmem:[%s247] sm:$0xff] %v369
        $region48: #{tpu_custom_call.1} parent=31 // pred_fallthru
          _
        // Predicated region
        $region49: #{tpu_custom_call.1} parent=31 // pred_check
          %p371 = pneg %p359
        $region50: #{tpu_custom_call.1} parent=31 // pred_check_branch
          %373 = sbr.rel (%p371) target = $region52
        $region51: #{tpu_custom_call.1} parent=31 // pred_region
          %v374 = vld [vmem:[%s247] sm:$0xff]
          %v375 = vld [vmem:[%s251] sm:$0x1]
          %v377 = vlaneseq
          %v378 = vshrl.u32 %v377, 7
          %v379 = vsub.s32 0, %v378
          %v380 = vrot.slane %v375, %v379
          %v382 = vadd.f32 %v374, %v380
          %383 = vst [vmem:[%s247] sm:$0xff] %v382
        $region52: #{tpu_custom_call.1} parent=31 // pred_fallthru
          _
        %s384 = sand.u32 %s132, 1
        %s385 = scalar_lea.sflag [#allocation4], %s384
        %s386 = sand.u32 %s132, 1
        %s387 = smul.addr %s386, 8
        %s388 = scalar_lea.vmem [#allocation7], %s387
        // Predicated region
        $region53: #{tpu_custom_call.1} parent=31 // pred_check
          %p389 = pneg %p142
        $region54: #{tpu_custom_call.1} parent=31 // pred_check_branch
          %391 = sbr.rel (%p389) target = $region56
        $region55: #{tpu_custom_call.1} parent=31 // pred_region
          %s393 = ssub.s32 128, 128
          %394 = vsyncadd %s385, %s393
          %s395 = smul.addr %s26, 2
          %s396 = sadd.s32 %s27, %s395
          %s397 = smul.addr %s396, 128
          %s398 = scalar_lea.hbm %s3, %s397
          %s400 = sshll.u32 %s388, 4
          %s401 = int_to_ptr.vmem [resolvable:$true] %s400
          %403 = dma.vmem_to_hbm [thread:$0]  %s401, 128, %s398, %s385
        $region56: #{tpu_custom_call.1} parent=31 // pred_fallthru
          _
      $region32: #{tpu_custom_call.1} parent=5 // pred_fallthru
        _
      %p404 = scmp.le.s32.totalorder 2, %s16
      // Predicated region
      $region57: #{tpu_custom_call.1} parent=5 // pred_check
        %p405 = pneg %p404
      $region58: #{tpu_custom_call.1} parent=5 // pred_check_branch
        %407 = sbr.rel (%p405) target = $region60
      $region59: #{tpu_custom_call.1} parent=5 // pred_region
        %s408 = ssub.s32 %s16, 2
        // Predicated region
        $region61: #{tpu_custom_call.1} parent=59 // pred_check
          %p409 = pneg %p148
        $region62: #{tpu_custom_call.1} parent=59 // pred_check_branch
          %411 = sbr.rel (%p409) target = $region64
        $region63: #{tpu_custom_call.1} parent=59 // pred_region
          %s412 = sand.u32 %s133, 1
          %s413 = scalar_lea.sflag [#allocation4], %s412
          %s414 = sand.u32 %s133, 1
          %s415 = smul.addr %s414, 8
          %s416 = scalar_lea.vmem [#allocation7], %s415
          %417 = dma.done %s413, 128
        $region64: #{tpu_custom_call.1} parent=59 // pred_fallthru
          _
      $region60: #{tpu_custom_call.1} parent=5 // pred_fallthru
        _
    $region6: #{tpu_custom_call.1} parent=1 // loop_footer
      %s20 = sadd.s32 1, %s16
    $region7: #{tpu_custom_call.1} parent=1 // loop_footer_branch
      %15 = sbr.rel target = $region3
    $region8: #{tpu_custom_call.1} parent=1 // loop_exit
      _
    %418 = vsyncpa [#allocation3], 1
    %s419 = scalar_lea.sflag [#allocation3], 1
    %420 = vsyncpa %s419, 1
    %421 = vsyncpa [#allocation6], 1
    %s422 = scalar_lea.sflag [#allocation6], 1
    %423 = vsyncpa %s422, 1
    %424 = vsyncpa [#allocation4], 1
    %s425 = scalar_lea.sflag [#allocation4], 1
    %426 = vsyncpa %s425, 1

</llo_original>
